<compile_context>
chip_gen: v7x
topology: tpu7x:2x2x1
jax: 0.10.0
libtpu: 0.0.40
codegen_flags: <defaults>
</compile_context>

<pallas_src>
import functools

import jax
import jax.numpy as jnp
from jax.experimental import pallas as pl
from jax.experimental.pallas import tpu as pltpu


def _round_up(n, m):
    return (n + m - 1) // m * m


def _vmem_capacity_bytes():
    try:
        return int(pltpu.get_tpu_info().vmem_capacity_bytes)
    except Exception:
        return 64 * 2**20  # conservative fallback: v7x per-TensorCore VMEM


def _choose_tb(batch, vmem_cap):
    """Batch-tile rows: multiple of 16 (bf16 sublane packing), generation-aware cap,
    and >= 2 grid steps when the batch allows it (v7x megacore sharding)."""
    cap = 128 if vmem_cap <= 64 * 2**20 else 512   # v7x vs v5e/v6e
    tb = min(cap, _round_up(batch, 16))
    if _round_up(batch, tb) // tb < 2 and tb >= 32:
        tb = max(16, _round_up(tb // 2, 16))
    return tb


def _fused_mlp_kernel(*refs, num_layers):
    """Fused MLP: h = x; for each layer l: h = relu(h @ W_l + b_l).

    refs = (x_ref, w0, b0, w1, b1, ..., w_{L-1}, b_{L-1}, o_ref)
    x / W are bf16 (MXU operands); accumulation, bias add and ReLU are f32.
    """
    x_ref = refs[0]
    o_ref = refs[1 + 2 * num_layers]

    h = x_ref[...]                                   # bf16 (TB, Dp_in)
    for l in range(num_layers):
        w = refs[1 + 2 * l][...]                     # bf16 (Dp_l, Dp_{l+1}), VMEM-resident
        b = refs[2 + 2 * l][...]                     # f32  (1, Dp_{l+1})
        acc = jnp.dot(h, w, preferred_element_type=jnp.float32)   # MXU, f32 accum
        acc = jnp.maximum(acc + b, 0.0)              # f32 epilogue on VPU
        h = acc.astype(jnp.bfloat16) if l + 1 < num_layers else acc
    o_ref[...] = h.astype(o_ref.dtype)


def pack_params(params):
    """One-time packing (do at init, NOT per forward): pad every feature dim to a
    multiple of 128 and cast weights to bf16. Returns (packed, dims)."""
    dims = [params[0][0].shape[0]] + [w.shape[1] for (w, _) in params]
    pdims = [_round_up(d, 128) for d in dims]
    packed = []
    for l, (w, b) in enumerate(params):
        di, do = w.shape
        pi, po = pdims[l], pdims[l + 1]
        w_p = jnp.zeros((pi, po), jnp.bfloat16).at[:di, :do].set(w.astype(jnp.bfloat16))
        b_p = jnp.zeros((1, po), jnp.float32).at[0, :do].set(b.astype(jnp.float32))
        packed.append((w_p, b_p))
    return packed, tuple(dims)


@functools.partial(jax.jit, static_argnames=("dims", "out_dtype"))
def mlp_forward_packed(x, packed, *, dims, out_dtype=jnp.float32):
    """MLP forward on pre-packed params. x: (B, D_in) f32 (or bf16)."""
    B, D_in = x.shape
    assert D_in == dims[0], "x feature dim does not match packed params"
    num_layers = len(packed)
    pdims = [_round_up(d, 128) for d in dims]

    vmem_cap = _vmem_capacity_bytes()
    TB = _choose_tb(B, vmem_cap)
    B_pad = _round_up(B, TB)

    # Conditional padding: skip the extra HBM read+write pass when already aligned.
    if B_pad == B and pdims[0] == D_in:
        x_p = x.astype(jnp.bfloat16)
    else:
        x_p = jnp.zeros((B_pad, pdims[0]), jnp.bfloat16).at[:B, :D_in].set(
            x.astype(jnp.bfloat16))

    flat_inputs = [x_p]
    in_specs = [pl.BlockSpec((TB, pdims[0]), lambda i: (i, 0))]
    for l, (w_p, b_p) in enumerate(packed):
        pi, po = pdims[l], pdims[l + 1]
        assert w_p.shape == (pi, po) and b_p.shape == (1, po)
        flat_inputs += [w_p, b_p]
        # Constant index_map -> weights/biases stay VMEM-resident across batch tiles.
        in_specs += [
            pl.BlockSpec((pi, po), lambda i: (0, 0)),
            pl.BlockSpec((1, po), lambda i: (0, 0)),
        ]

    # --- VMEM footprint / scoped-limit sizing ---
    out_bytes = jnp.dtype(out_dtype).itemsize
    weight_bytes = sum(pdims[l] * pdims[l + 1] * 2 for l in range(num_layers))
    bias_bytes = sum(pdims[l + 1] * 4 for l in range(num_layers))
    io_tile_bytes = TB * pdims[0] * 2 + TB * pdims[-1] * out_bytes
    act_bytes = TB * max(pdims) * 6            # f32 accumulator + bf16 recast of h
    footprint = 2 * (weight_bytes + bias_bytes + io_tile_bytes) + 2 * act_bytes
    if footprint > vmem_cap:
        # TODO(synk): fall back to a K-/layer-tiled weight pipeline
        # (pltpu.emit_pipeline + f32 VMEM accumulator) when resident bf16 weights
        # plus activation scratch exceed per-core VMEM (v7x: 64 MiB).
        raise ValueError(
            f"Resident-weight MLP kernel needs ~{footprint} B VMEM > {vmem_cap} B.")
    vmem_limit = int(min(vmem_cap, max(int(footprint * 1.3), 32 * 2**20)))

    cost = pl.CostEstimate(
        flops=2 * B_pad * sum(pdims[l] * pdims[l + 1] for l in range(num_layers)),
        transcendentals=0,
        bytes_accessed=(B_pad * pdims[0] * 2 + weight_bytes + bias_bytes
                        + B_pad * pdims[-1] * out_bytes),
    )

    out_p = pl.pallas_call(
        functools.partial(_fused_mlp_kernel, num_layers=num_layers),
        out_shape=jax.ShapeDtypeStruct((B_pad, pdims[-1]), out_dtype),
        grid=(B_pad // TB,),
        in_specs=in_specs,
        out_specs=pl.BlockSpec((TB, pdims[-1]), lambda i: (i, 0)),
        compiler_params=pltpu.CompilerParams(
            dimension_semantics=("parallel",),     # megacore split on v7x
            vmem_limit_bytes=vmem_limit),
        cost_estimate=cost,
    )(*flat_inputs)

    return out_p[:B, :dims[-1]]


def mlp_forward(x, params):
    """Convenience wrapper (packs per call). Prefer pack_params once + mlp_forward_packed."""
    packed, dims = pack_params(params)
    return mlp_forward_packed(x, packed, dims=dims, out_dtype=jnp.float32)


def init_mlp_params(key, input_dim, hidden_dims):
    """Deterministic synthetic params. Weights stored as (D_in, D_out) (transposed vs PyTorch)."""
    params = []
    dims = [input_dim] + list(hidden_dims)
    for i in range(len(hidden_dims)):
        key, kw, kb = jax.random.split(key, 3)
        fan_in = dims[i]
        bound = 1.0 / jnp.sqrt(fan_in)
        w = jax.random.uniform(kw, (dims[i], dims[i + 1]), jnp.float32, -bound, bound)
        b = jax.random.uniform(kb, (dims[i + 1],), jnp.float32, -bound, bound)
        params.append((w, b))
    return params


def mlp_reference(x, params):
    """Pure-JAX reference mirroring the kernel's bf16-operand / f32-accumulate numerics."""
    h = x.astype(jnp.bfloat16)
    out = None
    for (w, b) in params:
        acc = jnp.dot(h, w.astype(jnp.bfloat16), preferred_element_type=jnp.float32)
        acc = jnp.maximum(acc + b.astype(jnp.float32), 0.0)
        out = acc
        h = acc.astype(jnp.bfloat16)
    return out


if __name__ == "__main__":
    key = jax.random.PRNGKey(0)
    B = 8
    input_dim = 32
    hidden_dims = [64, 32]

    key, kx = jax.random.split(key)
    x = jax.random.normal(kx, (B, input_dim), jnp.float32)
    params = init_mlp_params(key, input_dim, hidden_dims)

    # One-time packing at init, jitted forward afterwards.
    packed, dims = pack_params(params)
    out = jax.block_until_ready(
        mlp_forward_packed(x, packed, dims=dims, out_dtype=jnp.float32))
    ref = mlp_reference(x, params)

    assert out.shape == (B, hidden_dims[-1])
    assert jnp.allclose(out, ref, atol=1e-4, rtol=1e-4), "mismatch vs reference"

    print("KERNEL_OK")
</pallas_src>

<mosaic_0001>
module attributes {stable_mosaic.version = 11 : i64} {
  func.func @_fused_mlp_kernel(%arg0: i32, %arg1: memref<16x128xbf16, #tpu.memory_space<vmem>>, %arg2: memref<128x128xbf16, #tpu.memory_space<vmem>>, %arg3: memref<1x128xf32, #tpu.memory_space<vmem>>, %arg4: memref<128x128xbf16, #tpu.memory_space<vmem>>, %arg5: memref<1x128xf32, #tpu.memory_space<vmem>>, %arg6: memref<16x128xf32, #tpu.memory_space<vmem>>) attributes {dimension_semantics = [#tpu.dimension_semantics<parallel>], iteration_bounds = array<i64: 1>, scalar_prefetch = 0 : i64, scratch_operands = 0 : i64, tpu.core_type = #tpu.core_type<tc>, window_params = [{transform_indices = @transform_0, window_bounds = array<i64: 16, 128>}, {pipeline_mode = #tpu.pipeline_mode<synchronous>, transform_indices = @transform_1, window_bounds = array<i64: 128, 128>}, {pipeline_mode = #tpu.pipeline_mode<synchronous>, transform_indices = @transform_2, window_bounds = array<i64: 1, 128>}, {pipeline_mode = #tpu.pipeline_mode<synchronous>, transform_indices = @transform_3, window_bounds = array<i64: 128, 128>}, {pipeline_mode = #tpu.pipeline_mode<synchronous>, transform_indices = @transform_4, window_bounds = array<i64: 1, 128>}, {transform_indices = @transform_5, window_bounds = array<i64: 16, 128>}]} {
    %c0 = arith.constant 0 : index
    %c0_0 = arith.constant 0 : index
    %0 = vector.load %arg1[%c0, %c0_0] : memref<16x128xbf16, #tpu.memory_space<vmem>>, vector<16x128xbf16>
    %c0_1 = arith.constant 0 : index
    %c0_2 = arith.constant 0 : index
    %1 = vector.load %arg2[%c0_1, %c0_2] : memref<128x128xbf16, #tpu.memory_space<vmem>>, vector<128x128xbf16>
    %c0_3 = arith.constant 0 : index
    %c0_4 = arith.constant 0 : index
    %2 = vector.load %arg3[%c0_3, %c0_4] : memref<1x128xf32, #tpu.memory_space<vmem>>, vector<1x128xf32>
    %cst = arith.constant dense<0.000000e+00> : vector<16x128xf32>
    %3 = tpu.matmul %0, %1, %cst {dimension_numbers = #tpu.dot_dimension_numbers<[1], [0], [0], [1], [0, 0, 1, 1], [], []>} : vector<16x128xbf16>, vector<128x128xbf16>, vector<16x128xf32> -> vector<16x128xf32>
    %4 = vector.broadcast %2 : vector<1x128xf32> to vector<16x128xf32>
    %5 = arith.addf %3, %4 : vector<16x128xf32>
    %cst_5 = arith.constant 0.000000e+00 : f32
    %6 = vector.broadcast %cst_5 : f32 to vector<16x128xf32>
    %7 = arith.maximumf %5, %6 : vector<16x128xf32>
    %8 = arith.truncf %7 : vector<16x128xf32> to vector<16x128xbf16>
    %c0_6 = arith.constant 0 : index
    %c0_7 = arith.constant 0 : index
    %9 = vector.load %arg4[%c0_6, %c0_7] : memref<128x128xbf16, #tpu.memory_space<vmem>>, vector<128x128xbf16>
    %c0_8 = arith.constant 0 : index
    %c0_9 = arith.constant 0 : index
    %10 = vector.load %arg5[%c0_8, %c0_9] : memref<1x128xf32, #tpu.memory_space<vmem>>, vector<1x128xf32>
    %cst_10 = arith.constant dense<0.000000e+00> : vector<16x128xf32>
    %11 = tpu.matmul %8, %9, %cst_10 {dimension_numbers = #tpu.dot_dimension_numbers<[1], [0], [0], [1], [0, 0, 1, 1], [], []>} : vector<16x128xbf16>, vector<128x128xbf16>, vector<16x128xf32> -> vector<16x128xf32>
    %12 = vector.broadcast %10 : vector<1x128xf32> to vector<16x128xf32>
    %13 = arith.addf %11, %12 : vector<16x128xf32>
    %cst_11 = arith.constant 0.000000e+00 : f32
    %14 = vector.broadcast %cst_11 : f32 to vector<16x128xf32>
    %15 = arith.maximumf %13, %14 : vector<16x128xf32>
    %c0_12 = arith.constant 0 : index
    %c0_13 = arith.constant 0 : index
    %16 = vector.load %arg6[%c0_12, %c0_13] : memref<16x128xf32, #tpu.memory_space<vmem>>, vector<16x128xf32>
    tpu.vector_store %arg6[%c0_12, %c0_13], %15 {strides = array<i32>} : memref<16x128xf32, #tpu.memory_space<vmem>>, vector<16x128xf32>,
    return
  }
  func.func @transform_0(%arg0: i32) -> (i32, i32) {
    %c0_i32 = arith.constant 0 : i32
    %c0_i32_0 = arith.constant 0 : i32
    return %arg0, %c0_i32 : i32, i32
  }
  func.func @transform_1(%arg0: i32) -> (i32, i32) {
    %c0_i32 = arith.constant 0 : i32
    %c0_i32_0 = arith.constant 0 : i32
    %c0_i32_1 = arith.constant 0 : i32
    return %c0_i32, %c0_i32_0 : i32, i32
  }
  func.func @transform_2(%arg0: i32) -> (i32, i32) {
    %c0_i32 = arith.constant 0 : i32
    %c0_i32_0 = arith.constant 0 : i32
    %c0_i32_1 = arith.constant 0 : i32
    return %c0_i32, %c0_i32_0 : i32, i32
  }
  func.func @transform_3(%arg0: i32) -> (i32, i32) {
    %c0_i32 = arith.constant 0 : i32
    %c0_i32_0 = arith.constant 0 : i32
    %c0_i32_1 = arith.constant 0 : i32
    return %c0_i32, %c0_i32_0 : i32, i32
  }
  func.func @transform_4(%arg0: i32) -> (i32, i32) {
    %c0_i32 = arith.constant 0 : i32
    %c0_i32_0 = arith.constant 0 : i32
    %c0_i32_1 = arith.constant 0 : i32
    return %c0_i32, %c0_i32_0 : i32, i32
  }
  func.func @transform_5(%arg0: i32) -> (i32, i32) {
    %c0_i32 = arith.constant 0 : i32
    %c0_i32_0 = arith.constant 0 : i32
    return %arg0, %c0_i32 : i32, i32
  }
}

</mosaic_0001>

<llo_original>
// kernel: mlp_forward_packed.1
$region0: #{mlp_forward_packed.1}
  #allocation0 [shape = 'u32[]', space=smem, size = 0x4, offset = 0x4, fixed_abs, tag = 'smem constant byte address 0x4 - core index']
  #allocation1 [shape = 'u32[144,128]{1,0:T(1,128)}', space=vmem, size = 0x12000, scoped, tag = 'internal scratch']
  %s0 = inlined_call_operand.vmem [shape: bf16[16,128], index: 0, kind: input, shape index: {}]
  %s1 = inlined_call_operand.hbm [shape: bf16[128,128], index: 1, kind: input, shape index: {}]
  %s2 = inlined_call_operand.vmem [shape: f32[1,128], index: 2, kind: input, shape index: {}]
  %s3 = inlined_call_operand.hbm [shape: bf16[128,128], index: 3, kind: input, shape index: {}]
  %s4 = inlined_call_operand.vmem [shape: f32[1,128], index: 4, kind: input, shape index: {}]
  %s5 = inlined_call_operand.vmem [shape: f32[16,128], index: 5, kind: output, shape index: {}]
  %s6 = sld [smem:[#allocation0]]
  $region38: #{mlp_forward_packed.1} parent=0
    _
  %s8 = ssub.s32 1, %s6
  %s9 = scalar_select 0, %s8, %s6
  $region1: #{mlp_forward_packed.1} parent=0
    #allocation2 [shape = 'u8[32768]{0}', space=vmem, size = 0x8000, scoped, tag = 'input window, operand 1, single buffered']
    #allocation3 [shape = 's32[1]{0}', space=sflag, size = 0x4, scoped, tag = 'scoped memory for mlp_forward_packed.1']
    #allocation4 [shape = 'u8[32768]{0}', space=vmem, size = 0x8000, scoped, tag = 'input window, operand 3, single buffered']
    #allocation5 [shape = 's32[1]{0}', space=sflag, size = 0x4, scoped, tag = 'scoped memory for mlp_forward_packed.1']
    %10 = vsyncpa [#allocation3], 0
    %11 = vsyncpa [#allocation5], 0
    // Predicated region
    $region2: #{mlp_forward_packed.1} parent=1 // pred_check
      _
    $region3: #{mlp_forward_packed.1} parent=1 // pred_check_branch
      %13 = sbr.rel (0) target = $region5
    $region4: #{mlp_forward_packed.1} parent=1 // pred_region
      _
    $region5: #{mlp_forward_packed.1} parent=1 // pred_fallthru
      _
    // Predicated region
    $region6: #{mlp_forward_packed.1} parent=1 // pred_check
      _
    $region7: #{mlp_forward_packed.1} parent=1 // pred_check_branch
      %15 = sbr.rel (0) target = $region9
    $region8: #{mlp_forward_packed.1} parent=1 // pred_region
      %s17 = ssub.s32 1024, 1024
      %18 = vsyncadd [#allocation3], %s17
      %s19 = sshll.u32 [#allocation2], 4
      %s20 = int_to_ptr.vmem [resolvable:$true] %s19
      %25 = dma.hbm_to_vmem [thread:$0]  %s1, 1024, %s20, [#allocation3], 64, 64, 4
    $region9: #{mlp_forward_packed.1} parent=1 // pred_fallthru
      _
    // Predicated region
    $region10: #{mlp_forward_packed.1} parent=1 // pred_check
      _
    $region11: #{mlp_forward_packed.1} parent=1 // pred_check_branch
      %27 = sbr.rel (0) target = $region13
    $region12: #{mlp_forward_packed.1} parent=1 // pred_region
      _
    $region13: #{mlp_forward_packed.1} parent=1 // pred_fallthru
      _
    // Predicated region
    $region14: #{mlp_forward_packed.1} parent=1 // pred_check
      _
    $region15: #{mlp_forward_packed.1} parent=1 // pred_check_branch
      %29 = sbr.rel (0) target = $region17
    $region16: #{mlp_forward_packed.1} parent=1 // pred_region
      %s31 = ssub.s32 1024, 1024
      %32 = vsyncadd [#allocation5], %s31
      %s33 = sshll.u32 [#allocation4], 4
      %s34 = int_to_ptr.vmem [resolvable:$true] %s33
      %39 = dma.hbm_to_vmem [thread:$0]  %s3, 1024, %s34, [#allocation5], 64, 64, 4
    $region17: #{mlp_forward_packed.1} parent=1 // pred_fallthru
      _
    // Predicated region
    $region18: #{mlp_forward_packed.1} parent=1 // pred_check
      _
    $region19: #{mlp_forward_packed.1} parent=1 // pred_check_branch
      %41 = sbr.rel (0) target = $region21
    $region20: #{mlp_forward_packed.1} parent=1 // pred_region
      _
    $region21: #{mlp_forward_packed.1} parent=1 // pred_fallthru
      _
    // Predicated region
    $region22: #{mlp_forward_packed.1} parent=1 // pred_check
      _
    $region23: #{mlp_forward_packed.1} parent=1 // pred_check_branch
      %43 = sbr.rel (0) target = $region25
    $region24: #{mlp_forward_packed.1} parent=1 // pred_region
      %44 = dma.done [#allocation3], 1024
    $region25: #{mlp_forward_packed.1} parent=1 // pred_fallthru
      _
    // Predicated region
    $region26: #{mlp_forward_packed.1} parent=1 // pred_check
      _
    $region27: #{mlp_forward_packed.1} parent=1 // pred_check_branch
      %46 = sbr.rel (0) target = $region29
    $region28: #{mlp_forward_packed.1} parent=1 // pred_region
      %47 = dma.done [#allocation5], 1024
    $region29: #{mlp_forward_packed.1} parent=1 // pred_fallthru
      _
    %v49 = vld [vmem:[%s0] sm:$0xf]
    %v50 = vld [vmem:[%s0 + $0x4] sm:$0xf]
    %v51 = vld [vmem:[#allocation2] sm:$0xf]
    %v52 = vld [vmem:[#allocation2 + $0x4] sm:$0xf]
    %v53 = vld [vmem:[#allocation2 + $0x8] sm:$0xf]
    %v54 = vld [vmem:[#allocation2 + $0xc] sm:$0xf]
    %v55 = vld [vmem:[#allocation2 + $0x10] sm:$0xf]
    %v56 = vld [vmem:[#allocation2 + $0x14] sm:$0xf]
    %v57 = vld [vmem:[#allocation2 + $0x18] sm:$0xf]
    %v58 = vld [vmem:[#allocation2 + $0x1c] sm:$0xf]
    %v59 = vld [vmem:[#allocation2 + $0x20] sm:$0xf]
    %v60 = vld [vmem:[#allocation2 + $0x24] sm:$0xf]
    %v61 = vld [vmem:[#allocation2 + $0x28] sm:$0xf]
    %v62 = vld [vmem:[#allocation2 + $0x2c] sm:$0xf]
    %v63 = vld [vmem:[#allocation2 + $0x30] sm:$0xf]
    %v64 = vld [vmem:[#allocation2 + $0x34] sm:$0xf]
    %v65 = vld [vmem:[#allocation2 + $0x38] sm:$0xf]
    %v66 = vld [vmem:[#allocation2 + $0x3c] sm:$0xf]
    %v67 = vld [vmem:[%s2] sm:$0x1]
    %v69 = vlaneseq
    %v70 = vshrl.u32 %v69, 7
    %v71 = vsub.s32 0, %v70
    %v72 = vrot.slane %v67, %v71
    %v76 = vunpack.c.l.b16 %v49
    %v77 = vunpack.c.l.b16 %v50
    %v78 = vpack.c.b16 %v77, %v76
    %v96 = vunpack.c.l.b16 %v51
    %v97 = vunpack.c.l.b16 %v52
    %v98 = vunpack.c.l.b16 %v53
    %v99 = vunpack.c.l.b16 %v54
    %v100 = vunpack.c.l.b16 %v55
    %v101 = vunpack.c.l.b16 %v56
    %v102 = vunpack.c.l.b16 %v57
    %v103 = vunpack.c.l.b16 %v58
    %v104 = vunpack.c.l.b16 %v59
    %v105 = vunpack.c.l.b16 %v60
    %v106 = vunpack.c.l.b16 %v61
    %v107 = vunpack.c.l.b16 %v62
    %v108 = vunpack.c.l.b16 %v63
    %v109 = vunpack.c.l.b16 %v64
    %v110 = vunpack.c.l.b16 %v65
    %v111 = vunpack.c.l.b16 %v66
    %v112 = vpack.c.b16 %v97, %v96
    %v113 = vpack.c.b16 %v99, %v98
    %v114 = vpack.c.b16 %v101, %v100
    %v115 = vpack.c.b16 %v103, %v102
    %v116 = vpack.c.b16 %v105, %v104
    %v117 = vpack.c.b16 %v107, %v106
    %v118 = vpack.c.b16 %v109, %v108
    %v119 = vpack.c.b16 %v111, %v110
    %128 = vmatprep.subr.bf16.mxu0 0
    %129 = vmatpush1.bf16.msra.mxu0 %v112
    %130 = vmatprep.subr.bf16.mxu0 0
    %131 = vmatpush1.bf16.msra.mxu0 %v113
    %132 = vmatprep.subr.bf16.mxu0 0
    %133 = vmatpush1.bf16.msra.mxu0 %v114
    %134 = vmatprep.subr.bf16.mxu0 0
    %135 = vmatpush1.bf16.msra.mxu0 %v115
    %136 = vmatprep.subr.bf16.mxu0 0
    %137 = vmatpush1.bf16.msra.mxu0 %v116
    %138 = vmatprep.subr.bf16.mxu0 0
    %139 = vmatpush1.bf16.msra.mxu0 %v117
    %140 = vmatprep.subr.bf16.mxu0 0
    %141 = vmatpush1.bf16.msra.mxu0 %v118
    %142 = vmatprep.subr.bf16.mxu0 0
    %143 = vmatpush1.bf16.msra.mxu0 %v119
    %144 = vmatprep.subr.bf16.mxu0 0
    %145 = vmatpush1.bf16.msra.mxu0 0
    %146 = vmatprep.subr.bf16.mxu0 0
    %147 = vmatpush1.bf16.msra.mxu0 0
    %148 = vmatprep.subr.bf16.mxu0 0
    %149 = vmatpush1.bf16.msra.mxu0 0
    %150 = vmatprep.subr.bf16.mxu0 0
    %151 = vmatpush1.bf16.msra.mxu0 0
    %152 = vmatprep.subr.bf16.mxu0 0
    %153 = vmatpush1.bf16.msra.mxu0 0
    %154 = vmatprep.subr.bf16.mxu0 0
    %155 = vmatpush1.bf16.msra.mxu0 0
    %156 = vmatprep.subr.bf16.mxu0 0
    %157 = vmatpush1.bf16.msra.mxu0 0
    %158 = vmatprep.subr.bf16.mxu0 0
    %159 = vmatpush1.bf16.msra.mxu0 0
    %160 = vmatprep.mubr.bf16.mxu0 0
    %161 = vmatmul.mubr.bf16.gmra.mrb[0].mxu0 %v78
    %v162 = vpop.f32.mrb[0].mxu0
    %v163 = vadd.f32 %v72, %v162
    %v164 = vpop.f32.mrb[0].mxu0
    %v165 = vpop.f32.mrb[0].mxu0
    %v166 = vadd.f32 %v72, %v165
    %v167 = vpop.f32.mrb[0].mxu0
    %168 = vdwg.mxu0
    %v169 = vmax.f32 %v163, 0.0
    %v170 = vmax.f32 %v166, 0.0
    %v171 = vpack.c.bf16 %v170, %v169
    %v172 = vld [vmem:[#allocation4] sm:$0xf]
    %v173 = vld [vmem:[#allocation4 + $0x4] sm:$0xf]
    %v174 = vld [vmem:[#allocation4 + $0x8] sm:$0xf]
    %v175 = vld [vmem:[#allocation4 + $0xc] sm:$0xf]
    %v176 = vld [vmem:[#allocation4 + $0x10] sm:$0xf]
    %v177 = vld [vmem:[#allocation4 + $0x14] sm:$0xf]
    %v178 = vld [vmem:[#allocation4 + $0x18] sm:$0xf]
    %v179 = vld [vmem:[#allocation4 + $0x1c] sm:$0xf]
    %v180 = vld [vmem:[#allocation4 + $0x20] sm:$0xf]
    %v181 = vld [vmem:[#allocation4 + $0x24] sm:$0xf]
    %v182 = vld [vmem:[#allocation4 + $0x28] sm:$0xf]
    %v183 = vld [vmem:[#allocation4 + $0x2c] sm:$0xf]
    %v184 = vld [vmem:[#allocation4 + $0x30] sm:$0xf]
    %v185 = vld [vmem:[#allocation4 + $0x34] sm:$0xf]
    %v186 = vld [vmem:[#allocation4 + $0x38] sm:$0xf]
    %v187 = vld [vmem:[#allocation4 + $0x3c] sm:$0xf]
    %v188 = vld [vmem:[%s4] sm:$0x1]
    %v190 = vlaneseq
    %v191 = vshrl.u32 %v190, 7
    %v192 = vsub.s32 0, %v191
    %v193 = vrot.slane %v188, %v192
    %v211 = vunpack.c.l.b16 %v172
    %v212 = vunpack.c.l.b16 %v173
    %v213 = vunpack.c.l.b16 %v174
    %v214 = vunpack.c.l.b16 %v175
    %v215 = vunpack.c.l.b16 %v176
    %v216 = vunpack.c.l.b16 %v177
    %v217 = vunpack.c.l.b16 %v178
    %v218 = vunpack.c.l.b16 %v179
    %v219 = vunpack.c.l.b16 %v180
    %v220 = vunpack.c.l.b16 %v181
    %v221 = vunpack.c.l.b16 %v182
    %v222 = vunpack.c.l.b16 %v183
    %v223 = vunpack.c.l.b16 %v184
    %v224 = vunpack.c.l.b16 %v185
    %v225 = vunpack.c.l.b16 %v186
    %v226 = vunpack.c.l.b16 %v187
    %v227 = vpack.c.b16 %v212, %v211
    %v228 = vpack.c.b16 %v214, %v213
    %v229 = vpack.c.b16 %v216, %v215
    %v230 = vpack.c.b16 %v218, %v217
    %v231 = vpack.c.b16 %v220, %v219
    %v232 = vpack.c.b16 %v222, %v221
    %v233 = vpack.c.b16 %v224, %v223
    %v234 = vpack.c.b16 %v226, %v225
    %243 = vmatprep.subr.bf16.mxu0 0
    %244 = vmatpush1.bf16.msra.mxu0 %v227
    %245 = vmatprep.subr.bf16.mxu0 0
    %246 = vmatpush1.bf16.msra.mxu0 %v228
    %247 = vmatprep.subr.bf16.mxu0 0
    %248 = vmatpush1.bf16.msra.mxu0 %v229
    %249 = vmatprep.subr.bf16.mxu0 0
    %250 = vmatpush1.bf16.msra.mxu0 %v230
    %251 = vmatprep.subr.bf16.mxu0 0
    %252 = vmatpush1.bf16.msra.mxu0 %v231
    %253 = vmatprep.subr.bf16.mxu0 0
    %254 = vmatpush1.bf16.msra.mxu0 %v232
    %255 = vmatprep.subr.bf16.mxu0 0
    %256 = vmatpush1.bf16.msra.mxu0 %v233
    %257 = vmatprep.subr.bf16.mxu0 0
    %258 = vmatpush1.bf16.msra.mxu0 %v234
    %259 = vmatprep.subr.bf16.mxu0 0
    %260 = vmatpush1.bf16.msra.mxu0 0
    %261 = vmatprep.subr.bf16.mxu0 0
    %262 = vmatpush1.bf16.msra.mxu0 0
    %263 = vmatprep.subr.bf16.mxu0 0
    %264 = vmatpush1.bf16.msra.mxu0 0
    %265 = vmatprep.subr.bf16.mxu0 0
    %266 = vmatpush1.bf16.msra.mxu0 0
    %267 = vmatprep.subr.bf16.mxu0 0
    %268 = vmatpush1.bf16.msra.mxu0 0
    %269 = vmatprep.subr.bf16.mxu0 0
    %270 = vmatpush1.bf16.msra.mxu0 0
    %271 = vmatprep.subr.bf16.mxu0 0
    %272 = vmatpush1.bf16.msra.mxu0 0
    %273 = vmatprep.subr.bf16.mxu0 0
    %274 = vmatpush1.bf16.msra.mxu0 0
    %275 = vmatprep.mubr.bf16.mxu0 0
    %276 = vmatmul.mubr.bf16.gmra.mrb[0].mxu0 %v171
    %v277 = vpop.f32.mrb[0].mxu0
    %v278 = vadd.f32 %v193, %v277
    %v279 = vpop.f32.mrb[0].mxu0
    %v280 = vpop.f32.mrb[0].mxu0
    %v281 = vadd.f32 %v193, %v280
    %v282 = vpop.f32.mrb[0].mxu0
    %283 = vdwg.mxu0
    %v284 = vmax.f32 %v278, 0.0
    %v285 = vmax.f32 %v281, 0.0
    %286 = vst [vmem:[%s5] sm:$0xff] %v284
    %287 = vst [vmem:[%s5 + $0x8] sm:$0xff] %v285
    // Predicated region
    $region30: #{mlp_forward_packed.1} parent=1 // pred_check
      _
    $region31: #{mlp_forward_packed.1} parent=1 // pred_check_branch
      %289 = sbr.rel (0) target = $region33
    $region32: #{mlp_forward_packed.1} parent=1 // pred_region
      _
    $region33: #{mlp_forward_packed.1} parent=1 // pred_fallthru
      _
    // Predicated region
    $region34: #{mlp_forward_packed.1} parent=1 // pred_check
      _
    $region35: #{mlp_forward_packed.1} parent=1 // pred_check_branch
      %291 = sbr.rel (0) target = $region37
    $region36: #{mlp_forward_packed.1} parent=1 // pred_region
      _
    $region37: #{mlp_forward_packed.1} parent=1 // pred_fallthru
      _
    %292 = vsyncpa [#allocation3], 1
    %293 = vsyncpa [#allocation5], 1

</llo_original>
